<compile_context>
chip_gen: v6e
topology: v6e:2x2x1
jax: 0.10.0
libtpu: 0.0.40
codegen_flags: <defaults>
</compile_context>

<pallas_src>
import numpy as np
import jax
import jax.numpy as jnp
from jax import lax
from jax.experimental import pallas as pl
from jax.experimental.pallas import tpu as pltpu

HIDDEN = 100
H_PAD = 128      # hidden padded to one full lane tile


def rnn_fc_kernel(x_ref, w_ih_ref, w_hh_t_ref, b_ref, fc_w_ref, fc_b_ref,
                  y_ref, h_out_ref, xp_ref, h_all_ref):
    """ReLU-RNN recurrence + Linear(H,1) on (8,128)-aligned padded shapes.

    x_ref      (T, Bp, 1)   time-major input (feature dim is 1)
    w_ih_ref   (1, Hp)      W_ih^T, zero-padded
    w_hh_t_ref (Hp, Hp)     W_hh^T, zero-padded rows+cols
    b_ref      (1, Hp)      b_ih + b_hh, zero-padded
    fc_w_ref   (1, Hp)      fc.weight, zero-padded
    fc_b_ref   (1, 1)       fc.bias
    y_ref      (T, Bp)      per-step fc output
    h_out_ref  (Bp, Hp)     final hidden state
    xp_ref     (T, Bp, Hp)  VMEM scratch: precomputed input projection
    h_all_ref  (T, Bp, Hp)  VMEM scratch: all hidden states
    """
    T, Bp, _ = x_ref.shape
    Hp = w_hh_t_ref.shape[0]

    # (1) Input projection hoisted out of the recurrence. input_size == 1 so it
    #     is a pure VPU broadcast-multiply (lane broadcast of the size-1
    #     feature dim), not a matmul:  xp[t,b,:] = x[t,b,0]*W_ih^T + (b_ih+b_hh)
    xp_ref[...] = (x_ref[...] * w_ih_ref[...][None, :, :]
                   + b_ref[...][None, :, :])

    w_hh_t = w_hh_t_ref[...]                      # loop-invariant (Hp, Hp)

    # (2) Recurrence: h carried as a register value (no VMEM round-trip of h),
    #     a single 128x128 MXU matmul per step, fully unrolled (T is static)
    #     so the LLO scheduler sees across steps.
    def step(t, h_prev):
        pre = (jnp.dot(h_prev, w_hh_t, preferred_element_type=jnp.float32)
               + xp_ref[t])
        h = jnp.maximum(pre, 0.0)                 # relu nonlinearity
        h_all_ref[t] = h                          # lane-dense (Bp, Hp) store
        return h

    h_final = lax.fori_loop(0, T, step,
                            jnp.zeros((Bp, Hp), jnp.float32), unroll=True)
    h_out_ref[...] = h_final

    # (3) fc hoisted out of the time loop: one VPU multiply + lane reduction
    #     over all timesteps at once. Padded h columns and padded fc weights
    #     are exactly zero, so they contribute nothing.
    fc_w = fc_w_ref[...][None, :, :]              # (1, 1, Hp)
    y_ref[...] = jnp.sum(h_all_ref[...] * fc_w, axis=-1) + fc_b_ref[...]


def model_forward(x, params):
    """x: (B, T, 1) float32 (batch_first, like the PyTorch module)."""
    w_ih, w_hh, b_ih, b_hh, fc_w, fc_b = params
    B, T, _ = x.shape
    Bp = max(8, ((B + 7) // 8) * 8)               # batch padded to sublane tile
    H, Hp = HIDDEN, H_PAD

    # time-major input, batch zero-padded: (T, Bp, 1)
    x_tm = jnp.transpose(x, (1, 0, 2)).astype(jnp.float32)
    x_tm = jnp.pad(x_tm, ((0, 0), (0, Bp - B), (0, 0)))

    # Zero-padded weights/biases: padded hidden units stay exactly 0 through
    # the ReLU recurrence, so padding never contaminates real outputs.
    w_ih_row = jnp.pad(w_ih.T.astype(jnp.float32), ((0, 0), (0, Hp - H)))        # (1, Hp)
    w_hh_t   = jnp.pad(w_hh.T.astype(jnp.float32), ((0, Hp - H), (0, Hp - H)))   # (Hp, Hp)
    b_row    = jnp.pad((b_ih + b_hh).reshape(1, H).astype(jnp.float32),
                       ((0, 0), (0, Hp - H)))                                    # (1, Hp)
    fc_w_row = jnp.pad(fc_w.astype(jnp.float32), ((0, 0), (0, Hp - H)))          # (1, Hp)
    fc_b_2d  = fc_b.reshape(1, 1).astype(jnp.float32)                            # (1, 1)

    vmem = pl.BlockSpec(memory_space=pltpu.MemorySpace.VMEM)

    y_tb, h_final = pl.pallas_call(
        rnn_fc_kernel,
        out_shape=(
            jax.ShapeDtypeStruct((T, Bp), jnp.float32),
            jax.ShapeDtypeStruct((Bp, Hp), jnp.float32),
        ),
        in_specs=[vmem] * 6,
        out_specs=(vmem, vmem),
        scratch_shapes=[
            pltpu.VMEM((T, Bp, Hp), jnp.float32),   # xp (input projection)
            pltpu.VMEM((T, Bp, Hp), jnp.float32),   # h_all
        ],
        # TODO(synk): for very long sequences, chunk T with a grid axis
        # ("arbitrary", h carried) to bound the (T, Bp, 128) VMEM scratch,
        # especially on v7x (64 MiB VMEM).
    )(x_tm, w_ih_row, w_hh_t, b_row, fc_w_row, fc_b_2d)

    # PyTorch: out.contiguous().view(-1, H) flattens (B, T, H) row-major, so
    # row index is b*T + t -> transpose time-major y back to batch-major.
    out = jnp.transpose(y_tb[:, :B], (1, 0)).reshape(B * T, 1)
    hidden = h_final[:B, :H][None, :, :]           # (1, B, H)
    return out, hidden


def reference_forward(x, params):
    """Pure-JAX reference of the same semantics, for correctness check."""
    w_ih, w_hh, b_ih, b_hh, fc_w, fc_b = params
    B, T, _ = x.shape

    def step(h, x_t):
        pre = x_t @ w_ih.T + b_ih + h @ w_hh.T + b_hh
        h_new = jnp.maximum(pre, 0.0)
        return h_new, h_new

    h0 = jnp.zeros((B, HIDDEN), jnp.float32)
    x_tm = jnp.transpose(x, (1, 0, 2))                 # (T, B, 1)
    h_final, hs = lax.scan(step, h0, x_tm)             # hs: (T, B, H)
    out_bth = jnp.transpose(hs, (1, 0, 2))             # (B, T, H)
    out = out_bth.reshape(B * T, HIDDEN) @ fc_w.T + fc_b
    return out, h_final[None]


def init_params(key):
    """Deterministic init matching PyTorch shapes: U(-1/sqrt(H), 1/sqrt(H))."""
    k = 1.0 / np.sqrt(HIDDEN)
    ks = jax.random.split(key, 6)
    w_ih = jax.random.uniform(ks[0], (HIDDEN, 1), jnp.float32, -k, k)       # rnn.weight_ih_l0
    w_hh = jax.random.uniform(ks[1], (HIDDEN, HIDDEN), jnp.float32, -k, k)  # rnn.weight_hh_l0
    b_ih = jax.random.uniform(ks[2], (HIDDEN,), jnp.float32, -k, k)         # rnn.bias_ih_l0
    b_hh = jax.random.uniform(ks[3], (HIDDEN,), jnp.float32, -k, k)         # rnn.bias_hh_l0
    fc_w = jax.random.uniform(ks[4], (1, HIDDEN), jnp.float32, -k, k)       # fc.weight
    fc_b = jax.random.uniform(ks[5], (1,), jnp.float32, -k, k)              # fc.bias
    return (w_ih, w_hh, b_ih, b_hh, fc_w, fc_b)


if __name__ == "__main__":
    key = jax.random.PRNGKey(0)
    pkey, xkey = jax.random.split(key)

    params = init_params(pkey)

    B, T = 2, 8
    x = jax.random.normal(xkey, (B, T, 1), jnp.float32)   # (batch, seq, input=1)

    out, hidden = jax.jit(model_forward)(x, params)
    out = jax.block_until_ready(out)
    hidden = jax.block_until_ready(hidden)

    assert out.shape == (B * T, 1), out.shape
    assert hidden.shape == (1, B, HIDDEN), hidden.shape

    out_ref, hidden_ref = reference_forward(x, params)
    np.testing.assert_allclose(np.asarray(out), np.asarray(out_ref), rtol=1e-5, atol=1e-5)
    np.testing.assert_allclose(np.asarray(hidden), np.asarray(hidden_ref), rtol=1e-5, atol=1e-5)

    print("KERNEL_OK")
</pallas_src>

<mosaic_0001>
module attributes {stable_mosaic.version = 11 : i64} {
  func.func @rnn_fc_kernel(%arg0: memref<8x8x1xf32, #tpu.memory_space<vmem>>, %arg1: memref<1x128xf32, #tpu.memory_space<vmem>>, %arg2: memref<128x128xf32, #tpu.memory_space<vmem>>, %arg3: memref<1x128xf32, #tpu.memory_space<vmem>>, %arg4: memref<1x128xf32, #tpu.memory_space<vmem>>, %arg5: memref<1x1xf32, #tpu.memory_space<vmem>>, %arg6: memref<8x8xf32, #tpu.memory_space<vmem>>, %arg7: memref<8x128xf32, #tpu.memory_space<vmem>>, %arg8: memref<8x8x128xf32, #tpu.memory_space<vmem>>, %arg9: memref<8x8x128xf32, #tpu.memory_space<vmem>>) attributes {dimension_semantics = [], scalar_prefetch = 0 : i64, scratch_operands = 2 : i64, tpu.core_type = #tpu.core_type<tc>} {
    %c0 = arith.constant 0 : index
    %c0_0 = arith.constant 0 : index
    %c0_1 = arith.constant 0 : index
    %0 = vector.load %arg0[%c0, %c0_0, %c0_1] : memref<8x8x1xf32, #tpu.memory_space<vmem>>, vector<8x8x1xf32>
    %c0_2 = arith.constant 0 : index
    %c0_3 = arith.constant 0 : index
    %1 = vector.load %arg1[%c0_2, %c0_3] : memref<1x128xf32, #tpu.memory_space<vmem>>, vector<1x128xf32>
    %2 = vector.shape_cast %1 : vector<1x128xf32> to vector<1x1x128xf32>
    %3 = vector.broadcast %0 : vector<8x8x1xf32> to vector<8x8x128xf32>
    %4 = vector.broadcast %2 : vector<1x1x128xf32> to vector<8x8x128xf32>
    %5 = arith.mulf %3, %4 : vector<8x8x128xf32>
    %c0_4 = arith.constant 0 : index
    %c0_5 = arith.constant 0 : index
    %6 = vector.load %arg3[%c0_4, %c0_5] : memref<1x128xf32, #tpu.memory_space<vmem>>, vector<1x128xf32>
    %7 = vector.shape_cast %6 : vector<1x128xf32> to vector<1x1x128xf32>
    %8 = vector.broadcast %7 : vector<1x1x128xf32> to vector<8x8x128xf32>
    %9 = arith.addf %5, %8 : vector<8x8x128xf32>
    %c0_6 = arith.constant 0 : index
    %c0_7 = arith.constant 0 : index
    %c0_8 = arith.constant 0 : index
    %10 = vector.load %arg8[%c0_6, %c0_7, %c0_8] : memref<8x8x128xf32, #tpu.memory_space<vmem>>, vector<8x8x128xf32>
    tpu.vector_store %arg8[%c0_6, %c0_7, %c0_8], %9 {strides = array<i32>} : memref<8x8x128xf32, #tpu.memory_space<vmem>>, vector<8x8x128xf32>,
    %c0_9 = arith.constant 0 : index
    %c0_10 = arith.constant 0 : index
    %11 = vector.load %arg2[%c0_9, %c0_10] : memref<128x128xf32, #tpu.memory_space<vmem>>, vector<128x128xf32>
    %cst = arith.constant 0.000000e+00 : f32
    %12 = vector.broadcast %cst : f32 to vector<8x128xf32>
    %c0_i32 = arith.constant 0 : i32
    %cst_11 = arith.constant dense<0.000000e+00> : vector<8x128xf32>
    %13 = tpu.matmul %12, %11, %cst_11 {dimension_numbers = #tpu.dot_dimension_numbers<[1], [0], [0], [1], [0, 0, 1, 1], [], []>} : vector<8x128xf32>, vector<128x128xf32>, vector<8x128xf32> -> vector<8x128xf32>
    %14 = arith.index_cast %c0_i32 : i32 to index
    %c0_12 = arith.constant 0 : index
    %c0_13 = arith.constant 0 : index
    %15 = vector.load %arg8[%14, %c0_12, %c0_13] : memref<8x8x128xf32, #tpu.memory_space<vmem>>, vector<1x8x128xf32>
    %16 = vector.shape_cast %15 : vector<1x8x128xf32> to vector<8x128xf32>
    %17 = arith.addf %13, %16 : vector<8x128xf32>
    %cst_14 = arith.constant 0.000000e+00 : f32
    %18 = vector.broadcast %cst_14 : f32 to vector<8x128xf32>
    %19 = arith.maximumf %17, %18 : vector<8x128xf32>
    %20 = arith.index_cast %c0_i32 : i32 to index
    %c0_15 = arith.constant 0 : index
    %c0_16 = arith.constant 0 : index
    %21 = vector.load %arg9[%20, %c0_15, %c0_16] : memref<8x8x128xf32, #tpu.memory_space<vmem>>, vector<1x8x128xf32>
    %22 = vector.shape_cast %21 : vector<1x8x128xf32> to vector<8x128xf32>
    %23 = vector.shape_cast %19 : vector<8x128xf32> to vector<1x8x128xf32>
    tpu.vector_store %arg9[%20, %c0_15, %c0_16], %23 {strides = array<i32>} : memref<8x8x128xf32, #tpu.memory_space<vmem>>, vector<1x8x128xf32>,
    %c1_i32 = arith.constant 1 : i32
    %cst_17 = arith.constant dense<0.000000e+00> : vector<8x128xf32>
    %24 = tpu.matmul %19, %11, %cst_17 {dimension_numbers = #tpu.dot_dimension_numbers<[1], [0], [0], [1], [0, 0, 1, 1], [], []>} : vector<8x128xf32>, vector<128x128xf32>, vector<8x128xf32> -> vector<8x128xf32>
    %25 = arith.index_cast %c1_i32 : i32 to index
    %c0_18 = arith.constant 0 : index
    %c0_19 = arith.constant 0 : index
    %26 = vector.load %arg8[%25, %c0_18, %c0_19] : memref<8x8x128xf32, #tpu.memory_space<vmem>>, vector<1x8x128xf32>
    %27 = vector.shape_cast %26 : vector<1x8x128xf32> to vector<8x128xf32>
    %28 = arith.addf %24, %27 : vector<8x128xf32>
    %cst_20 = arith.constant 0.000000e+00 : f32
    %29 = vector.broadcast %cst_20 : f32 to vector<8x128xf32>
    %30 = arith.maximumf %28, %29 : vector<8x128xf32>
    %31 = arith.index_cast %c1_i32 : i32 to index
    %c0_21 = arith.constant 0 : index
    %c0_22 = arith.constant 0 : index
    %32 = vector.load %arg9[%31, %c0_21, %c0_22] : memref<8x8x128xf32, #tpu.memory_space<vmem>>, vector<1x8x128xf32>
    %33 = vector.shape_cast %32 : vector<1x8x128xf32> to vector<8x128xf32>
    %34 = vector.shape_cast %30 : vector<8x128xf32> to vector<1x8x128xf32>
    tpu.vector_store %arg9[%31, %c0_21, %c0_22], %34 {strides = array<i32>} : memref<8x8x128xf32, #tpu.memory_space<vmem>>, vector<1x8x128xf32>,
    %c2_i32 = arith.constant 2 : i32
    %cst_23 = arith.constant dense<0.000000e+00> : vector<8x128xf32>
    %35 = tpu.matmul %30, %11, %cst_23 {dimension_numbers = #tpu.dot_dimension_numbers<[1], [0], [0], [1], [0, 0, 1, 1], [], []>} : vector<8x128xf32>, vector<128x128xf32>, vector<8x128xf32> -> vector<8x128xf32>
    %36 = arith.index_cast %c2_i32 : i32 to index
    %c0_24 = arith.constant 0 : index
    %c0_25 = arith.constant 0 : index
    %37 = vector.load %arg8[%36, %c0_24, %c0_25] : memref<8x8x128xf32, #tpu.memory_space<vmem>>, vector<1x8x128xf32>
    %38 = vector.shape_cast %37 : vector<1x8x128xf32> to vector<8x128xf32>
    %39 = arith.addf %35, %38 : vector<8x128xf32>
    %cst_26 = arith.constant 0.000000e+00 : f32
    %40 = vector.broadcast %cst_26 : f32 to vector<8x128xf32>
    %41 = arith.maximumf %39, %40 : vector<8x128xf32>
    %42 = arith.index_cast %c2_i32 : i32 to index
    %c0_27 = arith.constant 0 : index
    %c0_28 = arith.constant 0 : index
    %43 = vector.load %arg9[%42, %c0_27, %c0_28] : memref<8x8x128xf32, #tpu.memory_space<vmem>>, vector<1x8x128xf32>
    %44 = vector.shape_cast %43 : vector<1x8x128xf32> to vector<8x128xf32>
    %45 = vector.shape_cast %41 : vector<8x128xf32> to vector<1x8x128xf32>
    tpu.vector_store %arg9[%42, %c0_27, %c0_28], %45 {strides = array<i32>} : memref<8x8x128xf32, #tpu.memory_space<vmem>>, vector<1x8x128xf32>,
    %c3_i32 = arith.constant 3 : i32
    %cst_29 = arith.constant dense<0.000000e+00> : vector<8x128xf32>
    %46 = tpu.matmul %41, %11, %cst_29 {dimension_numbers = #tpu.dot_dimension_numbers<[1], [0], [0], [1], [0, 0, 1, 1], [], []>} : vector<8x128xf32>, vector<128x128xf32>, vector<8x128xf32> -> vector<8x128xf32>
    %47 = arith.index_cast %c3_i32 : i32 to index
    %c0_30 = arith.constant 0 : index
    %c0_31 = arith.constant 0 : index
    %48 = vector.load %arg8[%47, %c0_30, %c0_31] : memref<8x8x128xf32, #tpu.memory_space<vmem>>, vector<1x8x128xf32>
    %49 = vector.shape_cast %48 : vector<1x8x128xf32> to vector<8x128xf32>
    %50 = arith.addf %46, %49 : vector<8x128xf32>
    %cst_32 = arith.constant 0.000000e+00 : f32
    %51 = vector.broadcast %cst_32 : f32 to vector<8x128xf32>
    %52 = arith.maximumf %50, %51 : vector<8x128xf32>
    %53 = arith.index_cast %c3_i32 : i32 to index
    %c0_33 = arith.constant 0 : index
    %c0_34 = arith.constant 0 : index
    %54 = vector.load %arg9[%53, %c0_33, %c0_34] : memref<8x8x128xf32, #tpu.memory_space<vmem>>, vector<1x8x128xf32>
    %55 = vector.shape_cast %54 : vector<1x8x128xf32> to vector<8x128xf32>
    %56 = vector.shape_cast %52 : vector<8x128xf32> to vector<1x8x128xf32>
    tpu.vector_store %arg9[%53, %c0_33, %c0_34], %56 {strides = array<i32>} : memref<8x8x128xf32, #tpu.memory_space<vmem>>, vector<1x8x128xf32>,
    %c4_i32 = arith.constant 4 : i32
    %cst_35 = arith.constant dense<0.000000e+00> : vector<8x128xf32>
    %57 = tpu.matmul %52, %11, %cst_35 {dimension_numbers = #tpu.dot_dimension_numbers<[1], [0], [0], [1], [0, 0, 1, 1], [], []>} : vector<8x128xf32>, vector<128x128xf32>, vector<8x128xf32> -> vector<8x128xf32>
    %58 = arith.index_cast %c4_i32 : i32 to index
    %c0_36 = arith.constant 0 : index
    %c0_37 = arith.constant 0 : index
    %59 = vector.load %arg8[%58, %c0_36, %c0_37] : memref<8x8x128xf32, #tpu.memory_space<vmem>>, vector<1x8x128xf32>
    %60 = vector.shape_cast %59 : vector<1x8x128xf32> to vector<8x128xf32>
    %61 = arith.addf %57, %60 : vector<8x128xf32>
    %cst_38 = arith.constant 0.000000e+00 : f32
    %62 = vector.broadcast %cst_38 : f32 to vector<8x128xf32>
    %63 = arith.maximumf %61, %62 : vector<8x128xf32>
    %64 = arith.index_cast %c4_i32 : i32 to index
    %c0_39 = arith.constant 0 : index
    %c0_40 = arith.constant 0 : index
    %65 = vector.load %arg9[%64, %c0_39, %c0_40] : memref<8x8x128xf32, #tpu.memory_space<vmem>>, vector<1x8x128xf32>
    %66 = vector.shape_cast %65 : vector<1x8x128xf32> to vector<8x128xf32>
    %67 = vector.shape_cast %63 : vector<8x128xf32> to vector<1x8x128xf32>
    tpu.vector_store %arg9[%64, %c0_39, %c0_40], %67 {strides = array<i32>} : memref<8x8x128xf32, #tpu.memory_space<vmem>>, vector<1x8x128xf32>,
    %c5_i32 = arith.constant 5 : i32
    %cst_41 = arith.constant dense<0.000000e+00> : vector<8x128xf32>
    %68 = tpu.matmul %63, %11, %cst_41 {dimension_numbers = #tpu.dot_dimension_numbers<[1], [0], [0], [1], [0, 0, 1, 1], [], []>} : vector<8x128xf32>, vector<128x128xf32>, vector<8x128xf32> -> vector<8x128xf32>
    %69 = arith.index_cast %c5_i32 : i32 to index
    %c0_42 = arith.constant 0 : index
    %c0_43 = arith.constant 0 : index
    %70 = vector.load %arg8[%69, %c0_42, %c0_43] : memref<8x8x128xf32, #tpu.memory_space<vmem>>, vector<1x8x128xf32>
    %71 = vector.shape_cast %70 : vector<1x8x128xf32> to vector<8x128xf32>
    %72 = arith.addf %68, %71 : vector<8x128xf32>
    %cst_44 = arith.constant 0.000000e+00 : f32
    %73 = vector.broadcast %cst_44 : f32 to vector<8x128xf32>
    %74 = arith.maximumf %72, %73 : vector<8x128xf32>
    %75 = arith.index_cast %c5_i32 : i32 to index
    %c0_45 = arith.constant 0 : index
    %c0_46 = arith.constant 0 : index
    %76 = vector.load %arg9[%75, %c0_45, %c0_46] : memref<8x8x128xf32, #tpu.memory_space<vmem>>, vector<1x8x128xf32>
    %77 = vector.shape_cast %76 : vector<1x8x128xf32> to vector<8x128xf32>
    %78 = vector.shape_cast %74 : vector<8x128xf32> to vector<1x8x128xf32>
    tpu.vector_store %arg9[%75, %c0_45, %c0_46], %78 {strides = array<i32>} : memref<8x8x128xf32, #tpu.memory_space<vmem>>, vector<1x8x128xf32>,
    %c6_i32 = arith.constant 6 : i32
    %cst_47 = arith.constant dense<0.000000e+00> : vector<8x128xf32>
    %79 = tpu.matmul %74, %11, %cst_47 {dimension_numbers = #tpu.dot_dimension_numbers<[1], [0], [0], [1], [0, 0, 1, 1], [], []>} : vector<8x128xf32>, vector<128x128xf32>, vector<8x128xf32> -> vector<8x128xf32>
    %80 = arith.index_cast %c6_i32 : i32 to index
    %c0_48 = arith.constant 0 : index
    %c0_49 = arith.constant 0 : index
    %81 = vector.load %arg8[%80, %c0_48, %c0_49] : memref<8x8x128xf32, #tpu.memory_space<vmem>>, vector<1x8x128xf32>
    %82 = vector.shape_cast %81 : vector<1x8x128xf32> to vector<8x128xf32>
    %83 = arith.addf %79, %82 : vector<8x128xf32>
    %cst_50 = arith.constant 0.000000e+00 : f32
    %84 = vector.broadcast %cst_50 : f32 to vector<8x128xf32>
    %85 = arith.maximumf %83, %84 : vector<8x128xf32>
    %86 = arith.index_cast %c6_i32 : i32 to index
    %c0_51 = arith.constant 0 : index
    %c0_52 = arith.constant 0 : index
    %87 = vector.load %arg9[%86, %c0_51, %c0_52] : memref<8x8x128xf32, #tpu.memory_space<vmem>>, vector<1x8x128xf32>
    %88 = vector.shape_cast %87 : vector<1x8x128xf32> to vector<8x128xf32>
    %89 = vector.shape_cast %85 : vector<8x128xf32> to vector<1x8x128xf32>
    tpu.vector_store %arg9[%86, %c0_51, %c0_52], %89 {strides = array<i32>} : memref<8x8x128xf32, #tpu.memory_space<vmem>>, vector<1x8x128xf32>,
    %c7_i32 = arith.constant 7 : i32
    %cst_53 = arith.constant dense<0.000000e+00> : vector<8x128xf32>
    %90 = tpu.matmul %85, %11, %cst_53 {dimension_numbers = #tpu.dot_dimension_numbers<[1], [0], [0], [1], [0, 0, 1, 1], [], []>} : vector<8x128xf32>, vector<128x128xf32>, vector<8x128xf32> -> vector<8x128xf32>
    %91 = arith.index_cast %c7_i32 : i32 to index
    %c0_54 = arith.constant 0 : index
    %c0_55 = arith.constant 0 : index
    %92 = vector.load %arg8[%91, %c0_54, %c0_55] : memref<8x8x128xf32, #tpu.memory_space<vmem>>, vector<1x8x128xf32>
    %93 = vector.shape_cast %92 : vector<1x8x128xf32> to vector<8x128xf32>
    %94 = arith.addf %90, %93 : vector<8x128xf32>
    %cst_56 = arith.constant 0.000000e+00 : f32
    %95 = vector.broadcast %cst_56 : f32 to vector<8x128xf32>
    %96 = arith.maximumf %94, %95 : vector<8x128xf32>
    %97 = arith.index_cast %c7_i32 : i32 to index
    %c0_57 = arith.constant 0 : index
    %c0_58 = arith.constant 0 : index
    %98 = vector.load %arg9[%97, %c0_57, %c0_58] : memref<8x8x128xf32, #tpu.memory_space<vmem>>, vector<1x8x128xf32>
    %99 = vector.shape_cast %98 : vector<1x8x128xf32> to vector<8x128xf32>
    %100 = vector.shape_cast %96 : vector<8x128xf32> to vector<1x8x128xf32>
    tpu.vector_store %arg9[%97, %c0_57, %c0_58], %100 {strides = array<i32>} : memref<8x8x128xf32, #tpu.memory_space<vmem>>, vector<1x8x128xf32>,
    %c8_i32 = arith.constant 8 : i32
    %c0_59 = arith.constant 0 : index
    %c0_60 = arith.constant 0 : index
    %101 = vector.load %arg7[%c0_59, %c0_60] : memref<8x128xf32, #tpu.memory_space<vmem>>, vector<8x128xf32>
    tpu.vector_store %arg7[%c0_59, %c0_60], %96 {strides = array<i32>} : memref<8x128xf32, #tpu.memory_space<vmem>>, vector<8x128xf32>,
    %c0_61 = arith.constant 0 : index
    %c0_62 = arith.constant 0 : index
    %102 = vector.load %arg4[%c0_61, %c0_62] : memref<1x128xf32, #tpu.memory_space<vmem>>, vector<1x128xf32>
    %103 = vector.shape_cast %102 : vector<1x128xf32> to vector<1x1x128xf32>
    %c0_63 = arith.constant 0 : index
    %c0_64 = arith.constant 0 : index
    %c0_65 = arith.constant 0 : index
    %104 = vector.load %arg9[%c0_63, %c0_64, %c0_65] : memref<8x8x128xf32, #tpu.memory_space<vmem>>, vector<8x8x128xf32>
    %105 = vector.broadcast %103 : vector<1x1x128xf32> to vector<8x8x128xf32>
    %106 = arith.mulf %104, %105 : vector<8x8x128xf32>
    %cst_66 = arith.constant dense<0.000000e+00> : vector<8x8xf32>
    %107 = vector.multi_reduction <add>, %106, %cst_66 [2] : vector<8x8x128xf32> to vector<8x8xf32>
    %c0_67 = arith.constant 0 : index
    %c0_68 = arith.constant 0 : index
    %108 = vector.load %arg5[%c0_67, %c0_68] : memref<1x1xf32, #tpu.memory_space<vmem>>, vector<1x1xf32>
    %109 = vector.broadcast %108 : vector<1x1xf32> to vector<8x8xf32>
    %110 = arith.addf %107, %109 : vector<8x8xf32>
    %c0_69 = arith.constant 0 : index
    %c0_70 = arith.constant 0 : index
    %111 = vector.load %arg6[%c0_69, %c0_70] : memref<8x8xf32, #tpu.memory_space<vmem>>, vector<8x8xf32>
    tpu.vector_store %arg6[%c0_69, %c0_70], %110 {strides = array<i32>} : memref<8x8xf32, #tpu.memory_space<vmem>>, vector<8x8xf32>,
    return
  }
}

</mosaic_0001>

<llo_original>
// kernel: model_forward.1
$region0: #{model_forward.1}
  #allocation0 [shape = 'u32[]', space=smem, size = 0x4, offset = 0x4, fixed_abs, tag = 'smem constant byte address 0x4 - core index']
  #allocation1 [shape = 'u32[144,128]{1,0:T(1,128)}', space=vmem, size = 0x12000, scoped, tag = 'internal scratch']
  #allocation2 [shape = 'f32[8,8,128]{2,1,0:T(8,128)}', space=vmem, size = 0x8000, scoped, tag = 'scratch operand']
  #allocation3 [shape = 'f32[8,8,128]{2,1,0:T(8,128)}', space=vmem, size = 0x8000, scoped, tag = 'scratch operand']
  #allocation4 [shape = 'f32[1,1]{1,0:T(1,128)S(1)}', space=vmem, size = 0x200, scoped, tag = 'scoped memory for model_forward.1']
  %s0 = inlined_call_operand.vmem [shape: f32[8,8,1], index: 0, kind: input, shape index: {}]
  %s1 = inlined_call_operand.vmem [shape: f32[1,128], index: 1, kind: input, shape index: {}]
  %s2 = inlined_call_operand.vmem [shape: f32[128,128], index: 2, kind: input, shape index: {}]
  %s3 = inlined_call_operand.vmem [shape: f32[1,128], index: 3, kind: input, shape index: {}]
  %s4 = inlined_call_operand.vmem [shape: f32[1,128], index: 4, kind: input, shape index: {}]
  %s5 = inlined_call_operand.<no memory space> [shape: f32[1,1], index: 5, kind: input, shape index: {}]
  %s6 = inlined_call_operand.vmem [shape: f32[8,8], index: 6, kind: output, shape index: {0}]
  %s7 = inlined_call_operand.vmem [shape: f32[8,128], index: 7, kind: output, shape index: {1}]
  %8 = xla_tuple %s6, %s7
  %s9 = sld [smem:[#allocation0]]
  $region42: #{model_forward.1} parent=0
    _
  %s11 = ssub.s32 1, %s9
  %s12 = scalar_select 0, %s11, %s9
  %v13 = vstv %s5
  %14 = vst [vmem:[#allocation4] sm:$0x1] %v13
  // Predicated region
  $region2: #{model_forward.1} parent=0 // pred_check
    _
  $region3: #{model_forward.1} parent=0 // pred_check_branch
    %16 = sbr.rel (0) target = $region5
  $region4: #{model_forward.1} parent=0 // pred_region
    _
  $region5: #{model_forward.1} parent=0 // pred_fallthru
    _
  // Predicated region
  $region6: #{model_forward.1} parent=0 // pred_check
    _
  $region7: #{model_forward.1} parent=0 // pred_check_branch
    %18 = sbr.rel (0) target = $region9
  $region8: #{model_forward.1} parent=0 // pred_region
    _
  $region9: #{model_forward.1} parent=0 // pred_fallthru
    _
  // Predicated region
  $region10: #{model_forward.1} parent=0 // pred_check
    _
  $region11: #{model_forward.1} parent=0 // pred_check_branch
    %20 = sbr.rel (0) target = $region13
  $region12: #{model_forward.1} parent=0 // pred_region
    _
  $region13: #{model_forward.1} parent=0 // pred_fallthru
    _
  // Predicated region
  $region14: #{model_forward.1} parent=0 // pred_check
    _
  $region15: #{model_forward.1} parent=0 // pred_check_branch
    %22 = sbr.rel (0) target = $region17
  $region16: #{model_forward.1} parent=0 // pred_region
    _
  $region17: #{model_forward.1} parent=0 // pred_fallthru
    _
  // Predicated region
  $region18: #{model_forward.1} parent=0 // pred_check
    _
  $region19: #{model_forward.1} parent=0 // pred_check_branch
    %24 = sbr.rel (0) target = $region21
  $region20: #{model_forward.1} parent=0 // pred_region
    _
  $region21: #{model_forward.1} parent=0 // pred_fallthru
    _
  // Predicated region
  $region22: #{model_forward.1} parent=0 // pred_check
    _
  $region23: #{model_forward.1} parent=0 // pred_check_branch
    %26 = sbr.rel (0) target = $region25
  $region24: #{model_forward.1} parent=0 // pred_region
    _
  $region25: #{model_forward.1} parent=0 // pred_fallthru
    _
  %v27 = vld [vmem:[%s0] sm:$0xff]
  %v28 = vld [vmem:[%s0 + $0x8] sm:$0xff]
  %v29 = vld [vmem:[%s0 + $0x10] sm:$0xff]
  %v30 = vld [vmem:[%s0 + $0x18] sm:$0xff]
  %v31 = vld [vmem:[%s0 + $0x20] sm:$0xff]
  %v32 = vld [vmem:[%s0 + $0x28] sm:$0xff]
  %v33 = vld [vmem:[%s0 + $0x30] sm:$0xff]
  %v34 = vld [vmem:[%s0 + $0x38] sm:$0xff]
  %v35 = vld [vmem:[%s1] sm:$0x1]
  %37 = vset.pattern.permute.xlu0 0
  %38 = vperm.xlu0 %37, %v27
  %v39 = vpop.permute.xlu0 %38
  %42 = vset.pattern.permute.xlu0 0
  %43 = vperm.xlu0 %42, %v28
  %v44 = vpop.permute.xlu0 %43
  %47 = vset.pattern.permute.xlu0 0
  %48 = vperm.xlu0 %47, %v29
  %v49 = vpop.permute.xlu0 %48
  %52 = vset.pattern.permute.xlu0 0
  %53 = vperm.xlu0 %52, %v30
  %v54 = vpop.permute.xlu0 %53
  %57 = vset.pattern.permute.xlu0 0
  %58 = vperm.xlu0 %57, %v31
  %v59 = vpop.permute.xlu0 %58
  %62 = vset.pattern.permute.xlu0 0
  %63 = vperm.xlu0 %62, %v32
  %v64 = vpop.permute.xlu0 %63
  %67 = vset.pattern.permute.xlu0 0
  %68 = vperm.xlu0 %67, %v33
  %v69 = vpop.permute.xlu0 %68
  %72 = vset.pattern.permute.xlu0 0
  %73 = vperm.xlu0 %72, %v34
  %v74 = vpop.permute.xlu0 %73
  %v77 = vlaneseq
  %v78 = vshrl.u32 %v77, 7
  %v79 = vsub.s32 0, %v78
  %v80 = vrot.slane %v35, %v79
  %v82 = vmul.f32 %v39, %v80
  %v83 = vmul.f32 %v44, %v80
  %v84 = vmul.f32 %v49, %v80
  %v85 = vmul.f32 %v54, %v80
  %v86 = vmul.f32 %v59, %v80
  %v87 = vmul.f32 %v64, %v80
  %v88 = vmul.f32 %v69, %v80
  %v89 = vmul.f32 %v74, %v80
  %v90 = vld [vmem:[%s3] sm:$0x1]
  %v92 = vlaneseq
  %v93 = vshrl.u32 %v92, 7
  %v94 = vsub.s32 0, %v93
  %v95 = vrot.slane %v90, %v94
  %v97 = vadd.f32 %v82, %v95
  %v98 = vadd.f32 %v83, %v95
  %v99 = vadd.f32 %v84, %v95
  %v100 = vadd.f32 %v85, %v95
  %v101 = vadd.f32 %v86, %v95
  %v102 = vadd.f32 %v87, %v95
  %v103 = vadd.f32 %v88, %v95
  %v104 = vadd.f32 %v89, %v95
  %105 = vst [vmem:[#allocation2] sm:$0xff] %v97
  %106 = vst [vmem:[#allocation2 + $0x8] sm:$0xff] %v98
  %107 = vst [vmem:[#allocation2 + $0x10] sm:$0xff] %v99
  %108 = vst [vmem:[#allocation2 + $0x18] sm:$0xff] %v100
  %109 = vst [vmem:[#allocation2 + $0x20] sm:$0xff] %v101
  %110 = vst [vmem:[#allocation2 + $0x28] sm:$0xff] %v102
  %111 = vst [vmem:[#allocation2 + $0x30] sm:$0xff] %v103
  %112 = vst [vmem:[#allocation2 + $0x38] sm:$0xff] %v104
  %v113 = vld [vmem:[%s2] sm:$0xff]
  %v114 = vld [vmem:[%s2 + $0x8] sm:$0xff]
  %v115 = vld [vmem:[%s2 + $0x10] sm:$0xff]
  %v116 = vld [vmem:[%s2 + $0x18] sm:$0xff]
  %v117 = vld [vmem:[%s2 + $0x20] sm:$0xff]
  %v118 = vld [vmem:[%s2 + $0x28] sm:$0xff]
  %v119 = vld [vmem:[%s2 + $0x30] sm:$0xff]
  %v120 = vld [vmem:[%s2 + $0x38] sm:$0xff]
  %v121 = vld [vmem:[%s2 + $0x40] sm:$0xff]
  %v122 = vld [vmem:[%s2 + $0x48] sm:$0xff]
  %v123 = vld [vmem:[%s2 + $0x50] sm:$0xff]
  %v124 = vld [vmem:[%s2 + $0x58] sm:$0xff]
  %v125 = vld [vmem:[%s2 + $0x60] sm:$0xff]
  %v126 = vld [vmem:[%s2 + $0x68] sm:$0xff]
  %v127 = vld [vmem:[%s2 + $0x70] sm:$0xff]
  %v128 = vld [vmem:[%s2 + $0x78] sm:$0xff]
  %v129 = vld [vmem:[#allocation2] sm:$0xff]
  %130 = vmatprep.subr.mxu0 0.0
  %131 = vmatpush1.msra.mxu0 %v128
  %132 = vmatprep.subr.mxu0 0.0
  %133 = vmatpush1.msra.mxu0 %v127
  %134 = vmatprep.subr.mxu0 0.0
  %135 = vmatpush1.msra.mxu0 %v126
  %136 = vmatprep.subr.mxu0 0.0
  %137 = vmatpush1.msra.mxu0 %v125
  %138 = vmatprep.subr.mxu0 0.0
  %139 = vmatpush1.msra.mxu0 %v124
  %140 = vmatprep.subr.mxu0 0.0
  %141 = vmatpush1.msra.mxu0 %v123
  %142 = vmatprep.subr.mxu0 0.0
  %143 = vmatpush1.msra.mxu0 %v122
  %144 = vmatprep.subr.mxu0 0.0
  %145 = vmatpush1.msra.mxu0 %v121
  %146 = vmatprep.subr.mxu0 0.0
  %147 = vmatpush1.msra.mxu0 %v120
  %148 = vmatprep.subr.mxu0 0.0
  %149 = vmatpush1.msra.mxu0 %v119
  %150 = vmatprep.subr.mxu0 0.0
  %151 = vmatpush1.msra.mxu0 %v118
  %152 = vmatprep.subr.mxu0 0.0
  %153 = vmatpush1.msra.mxu0 %v117
  %154 = vmatprep.subr.mxu0 0.0
  %155 = vmatpush1.msra.mxu0 %v116
  %156 = vmatprep.subr.mxu0 0.0
  %157 = vmatpush1.msra.mxu0 %v115
  %158 = vmatprep.subr.mxu0 0.0
  %159 = vmatpush1.msra.mxu0 %v114
  %160 = vmatprep.subr.mxu0 0.0
  %161 = vmatpush1.msra.mxu0 %v113
  %162 = vmatprep.subr.mxu0 0.0
  %163 = vmatpush2.msra.mxu0 0.0
  %164 = vmatprep.subr.mxu0 0.0
  %165 = vmatpush2.msra.mxu0 0.0
  %166 = vmatprep.subr.mxu0 0.0
  %167 = vmatpush2.msra.mxu0 0.0
  %168 = vmatprep.subr.mxu0 0.0
  %169 = vmatpush2.msra.mxu0 0.0
  %170 = vmatprep.subr.mxu0 0.0
  %171 = vmatpush2.msra.mxu0 0.0
  %172 = vmatprep.subr.mxu0 0.0
  %173 = vmatpush2.msra.mxu0 0.0
  %174 = vmatprep.subr.mxu0 0.0
  %175 = vmatpush2.msra.mxu0 0.0
  %176 = vmatprep.subr.mxu0 0.0
  %177 = vmatpush2.msra.mxu0 0.0
  %178 = vmatprep.subr.mxu0 0.0
  %179 = vmatpush2.msra.mxu0 0.0
  %180 = vmatprep.subr.mxu0 0.0
  %181 = vmatpush2.msra.mxu0 0.0
  %182 = vmatprep.subr.mxu0 0.0
  %183 = vmatpush2.msra.mxu0 0.0
  %184 = vmatprep.subr.mxu0 0.0
  %185 = vmatpush2.msra.mxu0 0.0
  %186 = vmatprep.subr.mxu0 0.0
  %187 = vmatpush2.msra.mxu0 0.0
  %188 = vmatprep.subr.mxu0 0.0
  %189 = vmatpush2.msra.mxu0 0.0
  %190 = vmatprep.subr.mxu0 0.0
  %191 = vmatpush2.msra.mxu0 0.0
  %192 = vmatprep.subr.mxu0 0.0
  %193 = vmatpush2.msra.mxu0 0.0
  %194 = vmatprep.mubr.f32.mxu0 0.0
  %195 = vmatmul.mubr.f32.gmra.mxu0 0.0
  %v196 = vpop.f32.mrf.mxu0
  %v197 = vadd.f32 %v129, %v196
  %v198 = vpop.f32.mrf.mxu0
  %199 = vdwg.mxu0
  %v200 = vmax.f32 %v197, 0.0
  %201 = vst [vmem:[#allocation3] sm:$0xff] %v200
  %s202 = scalar_lea.vmem [#allocation2], 8
  %v203 = vld [vmem:[%s202] sm:$0xff]
  %204 = vmatprep.subr.mxu0 0.0
  %205 = vmatpush1.msra.mxu0 %v128
  %206 = vmatprep.subr.mxu0 0.0
  %207 = vmatpush1.msra.mxu0 %v127
  %208 = vmatprep.subr.mxu0 0.0
  %209 = vmatpush1.msra.mxu0 %v126
  %210 = vmatprep.subr.mxu0 0.0
  %211 = vmatpush1.msra.mxu0 %v125
  %212 = vmatprep.subr.mxu0 0.0
  %213 = vmatpush1.msra.mxu0 %v124
  %214 = vmatprep.subr.mxu0 0.0
  %215 = vmatpush1.msra.mxu0 %v123
  %216 = vmatprep.subr.mxu0 0.0
  %217 = vmatpush1.msra.mxu0 %v122
  %218 = vmatprep.subr.mxu0 0.0
  %219 = vmatpush1.msra.mxu0 %v121
  %220 = vmatprep.subr.mxu0 0.0
  %221 = vmatpush1.msra.mxu0 %v120
  %222 = vmatprep.subr.mxu0 0.0
  %223 = vmatpush1.msra.mxu0 %v119
  %224 = vmatprep.subr.mxu0 0.0
  %225 = vmatpush1.msra.mxu0 %v118
  %226 = vmatprep.subr.mxu0 0.0
  %227 = vmatpush1.msra.mxu0 %v117
  %228 = vmatprep.subr.mxu0 0.0
  %229 = vmatpush1.msra.mxu0 %v116
  %230 = vmatprep.subr.mxu0 0.0
  %231 = vmatpush1.msra.mxu0 %v115
  %232 = vmatprep.subr.mxu0 0.0
  %233 = vmatpush1.msra.mxu0 %v114
  %234 = vmatprep.subr.mxu0 0.0
  %235 = vmatpush1.msra.mxu0 %v113
  %236 = vmatprep.subr.mxu0 0.0
  %237 = vmatpush2.msra.mxu0 0.0
  %238 = vmatprep.subr.mxu0 0.0
  %239 = vmatpush2.msra.mxu0 0.0
  %240 = vmatprep.subr.mxu0 0.0
  %241 = vmatpush2.msra.mxu0 0.0
  %242 = vmatprep.subr.mxu0 0.0
  %243 = vmatpush2.msra.mxu0 0.0
  %244 = vmatprep.subr.mxu0 0.0
  %245 = vmatpush2.msra.mxu0 0.0
  %246 = vmatprep.subr.mxu0 0.0
  %247 = vmatpush2.msra.mxu0 0.0
  %248 = vmatprep.subr.mxu0 0.0
  %249 = vmatpush2.msra.mxu0 0.0
  %250 = vmatprep.subr.mxu0 0.0
  %251 = vmatpush2.msra.mxu0 0.0
  %252 = vmatprep.subr.mxu0 0.0
  %253 = vmatpush2.msra.mxu0 0.0
  %254 = vmatprep.subr.mxu0 0.0
  %255 = vmatpush2.msra.mxu0 0.0
  %256 = vmatprep.subr.mxu0 0.0
  %257 = vmatpush2.msra.mxu0 0.0
  %258 = vmatprep.subr.mxu0 0.0
  %259 = vmatpush2.msra.mxu0 0.0
  %260 = vmatprep.subr.mxu0 0.0
  %261 = vmatpush2.msra.mxu0 0.0
  %262 = vmatprep.subr.mxu0 0.0
  %263 = vmatpush2.msra.mxu0 0.0
  %264 = vmatprep.subr.mxu0 0.0
  %265 = vmatpush2.msra.mxu0 0.0
  %266 = vmatprep.subr.mxu0 0.0
  %267 = vmatpush2.msra.mxu0 0.0
  %268 = vmatprep.mubr.f32.mxu0 0.0
  %269 = vmatmul.mubr.f32.gmra.mxu0 %v200
  %v270 = vpop.f32.mrf.mxu0
  %v271 = vadd.f32 %v203, %v270
  %v272 = vpop.f32.mrf.mxu0
  %273 = vdwg.mxu0
  %v274 = vmax.f32 %v271, 0.0
  %s275 = scalar_lea.vmem [#allocation3], 8
  %276 = vst [vmem:[%s275] sm:$0xff] %v274
  %s277 = scalar_lea.vmem [#allocation2], 16
  %v278 = vld [vmem:[%s277] sm:$0xff]
  %279 = vmatprep.subr.mxu0 0.0
  %280 = vmatpush1.msra.mxu0 %v128
  %281 = vmatprep.subr.mxu0 0.0
  %282 = vmatpush1.msra.mxu0 %v127
  %283 = vmatprep.subr.mxu0 0.0
  %284 = vmatpush1.msra.mxu0 %v126
  %285 = vmatprep.subr.mxu0 0.0
  %286 = vmatpush1.msra.mxu0 %v125
  %287 = vmatprep.subr.mxu0 0.0
  %288 = vmatpush1.msra.mxu0 %v124
  %289 = vmatprep.subr.mxu0 0.0
  %290 = vmatpush1.msra.mxu0 %v123
  %291 = vmatprep.subr.mxu0 0.0
  %292 = vmatpush1.msra.mxu0 %v122
  %293 = vmatprep.subr.mxu0 0.0
  %294 = vmatpush1.msra.mxu0 %v121
  %295 = vmatprep.subr.mxu0 0.0
  %296 = vmatpush1.msra.mxu0 %v120
  %297 = vmatprep.subr.mxu0 0.0
  %298 = vmatpush1.msra.mxu0 %v119
  %299 = vmatprep.subr.mxu0 0.0
  %300 = vmatpush1.msra.mxu0 %v118
  %301 = vmatprep.subr.mxu0 0.0
  %302 = vmatpush1.msra.mxu0 %v117
  %303 = vmatprep.subr.mxu0 0.0
  %304 = vmatpush1.msra.mxu0 %v116
  %305 = vmatprep.subr.mxu0 0.0
  %306 = vmatpush1.msra.mxu0 %v115
  %307 = vmatprep.subr.mxu0 0.0
  %308 = vmatpush1.msra.mxu0 %v114
  %309 = vmatprep.subr.mxu0 0.0
  %310 = vmatpush1.msra.mxu0 %v113
  %311 = vmatprep.subr.mxu0 0.0
  %312 = vmatpush2.msra.mxu0 0.0
  %313 = vmatprep.subr.mxu0 0.0
  %314 = vmatpush2.msra.mxu0 0.0
  %315 = vmatprep.subr.mxu0 0.0
  %316 = vmatpush2.msra.mxu0 0.0
  %317 = vmatprep.subr.mxu0 0.0
  %318 = vmatpush2.msra.mxu0 0.0
  %319 = vmatprep.subr.mxu0 0.0
  %320 = vmatpush2.msra.mxu0 0.0
  %321 = vmatprep.subr.mxu0 0.0
  %322 = vmatpush2.msra.mxu0 0.0
  %323 = vmatprep.subr.mxu0 0.0
  %324 = vmatpush2.msra.mxu0 0.0
  %325 = vmatprep.subr.mxu0 0.0
  %326 = vmatpush2.msra.mxu0 0.0
  %327 = vmatprep.subr.mxu0 0.0
  %328 = vmatpush2.msra.mxu0 0.0
  %329 = vmatprep.subr.mxu0 0.0
  %330 = vmatpush2.msra.mxu0 0.0
  %331 = vmatprep.subr.mxu0 0.0
  %332 = vmatpush2.msra.mxu0 0.0
  %333 = vmatprep.subr.mxu0 0.0
  %334 = vmatpush2.msra.mxu0 0.0
  %335 = vmatprep.subr.mxu0 0.0
  %336 = vmatpush2.msra.mxu0 0.0
  %337 = vmatprep.subr.mxu0 0.0
  %338 = vmatpush2.msra.mxu0 0.0
  %339 = vmatprep.subr.mxu0 0.0
  %340 = vmatpush2.msra.mxu0 0.0
  %341 = vmatprep.subr.mxu0 0.0
  %342 = vmatpush2.msra.mxu0 0.0
  %343 = vmatprep.mubr.f32.mxu0 0.0
  %344 = vmatmul.mubr.f32.gmra.mxu0 %v274
  %v345 = vpop.f32.mrf.mxu0
  %v346 = vadd.f32 %v278, %v345
  %v347 = vpop.f32.mrf.mxu0
  %348 = vdwg.mxu0
  %v349 = vmax.f32 %v346, 0.0
  %s350 = scalar_lea.vmem [#allocation3], 16
  %351 = vst [vmem:[%s350] sm:$0xff] %v349
  %s352 = scalar_lea.vmem [#allocation2], 24
  %v353 = vld [vmem:[%s352] sm:$0xff]
  %354 = vmatprep.subr.mxu0 0.0
  %355 = vmatpush1.msra.mxu0 %v128
  %356 = vmatprep.subr.mxu0 0.0
  %357 = vmatpush1.msra.mxu0 %v127
  %358 = vmatprep.subr.mxu0 0.0
  %359 = vmatpush1.msra.mxu0 %v126
  %360 = vmatprep.subr.mxu0 0.0
  %361 = vmatpush1.msra.mxu0 %v125
  %362 = vmatprep.subr.mxu0 0.0
  %363 = vmatpush1.msra.mxu0 %v124
  %364 = vmatprep.subr.mxu0 0.0
  %365 = vmatpush1.msra.mxu0 %v123
  %366 = vmatprep.subr.mxu0 0.0
  %367 = vmatpush1.msra.mxu0 %v122
  %368 = vmatprep.subr.mxu0 0.0
  %369 = vmatpush1.msra.mxu0 %v121
  %370 = vmatprep.subr.mxu0 0.0
  %371 = vmatpush1.msra.mxu0 %v120
  %372 = vmatprep.subr.mxu0 0.0
  %373 = vmatpush1.msra.mxu0 %v119
  %374 = vmatprep.subr.mxu0 0.0
  %375 = vmatpush1.msra.mxu0 %v118
  %376 = vmatprep.subr.mxu0 0.0
  %377 = vmatpush1.msra.mxu0 %v117
  %378 = vmatprep.subr.mxu0 0.0
  %379 = vmatpush1.msra.mxu0 %v116
  %380 = vmatprep.subr.mxu0 0.0
  %381 = vmatpush1.msra.mxu0 %v115
  %382 = vmatprep.subr.mxu0 0.0
  %383 = vmatpush1.msra.mxu0 %v114
  %384 = vmatprep.subr.mxu0 0.0
  %385 = vmatpush1.msra.mxu0 %v113
  %386 = vmatprep.subr.mxu0 0.0
  %387 = vmatpush2.msra.mxu0 0.0
  %388 = vmatprep.subr.mxu0 0.0
  %389 = vmatpush2.msra.mxu0 0.0
  %390 = vmatprep.subr.mxu0 0.0
  %391 = vmatpush2.msra.mxu0 0.0
  %392 = vmatprep.subr.mxu0 0.0
  %393 = vmatpush2.msra.mxu0 0.0
  %394 = vmatprep.subr.mxu0 0.0
  %395 = vmatpush2.msra.mxu0 0.0
  %396 = vmatprep.subr.mxu0 0.0
  %397 = vmatpush2.msra.mxu0 0.0
  %398 = vmatprep.subr.mxu0 0.0
  %399 = vmatpush2.msra.mxu0 0.0
  %400 = vmatprep.subr.mxu0 0.0
  %401 = vmatpush2.msra.mxu0 0.0
  %402 = vmatprep.subr.mxu0 0.0
  %403 = vmatpush2.msra.mxu0 0.0
  %404 = vmatprep.subr.mxu0 0.0
  %405 = vmatpush2.msra.mxu0 0.0
  %406 = vmatprep.subr.mxu0 0.0
  %407 = vmatpush2.msra.mxu0 0.0
  %408 = vmatprep.subr.mxu0 0.0
  %409 = vmatpush2.msra.mxu0 0.0
  %410 = vmatprep.subr.mxu0 0.0
  %411 = vmatpush2.msra.mxu0 0.0
  %412 = vmatprep.subr.mxu0 0.0
  %413 = vmatpush2.msra.mxu0 0.0
  %414 = vmatprep.subr.mxu0 0.0
  %415 = vmatpush2.msra.mxu0 0.0
  %416 = vmatprep.subr.mxu0 0.0
  %417 = vmatpush2.msra.mxu0 0.0
  %418 = vmatprep.mubr.f32.mxu0 0.0
  %419 = vmatmul.mubr.f32.gmra.mxu0 %v349
  %v420 = vpop.f32.mrf.mxu0
  %v421 = vadd.f32 %v353, %v420
  %v422 = vpop.f32.mrf.mxu0
  %423 = vdwg.mxu0
  %v424 = vmax.f32 %v421, 0.0
  %s425 = scalar_lea.vmem [#allocation3], 24
  %426 = vst [vmem:[%s425] sm:$0xff] %v424
  %s427 = scalar_lea.vmem [#allocation2], 32
  %v428 = vld [vmem:[%s427] sm:$0xff]
  %429 = vmatprep.subr.mxu0 0.0
  %430 = vmatpush1.msra.mxu0 %v128
  %431 = vmatprep.subr.mxu0 0.0
  %432 = vmatpush1.msra.mxu0 %v127
  %433 = vmatprep.subr.mxu0 0.0
  %434 = vmatpush1.msra.mxu0 %v126
  %435 = vmatprep.subr.mxu0 0.0
  %436 = vmatpush1.msra.mxu0 %v125
  %437 = vmatprep.subr.mxu0 0.0
  %438 = vmatpush1.msra.mxu0 %v124
  %439 = vmatprep.subr.mxu0 0.0
  %440 = vmatpush1.msra.mxu0 %v123
  %441 = vmatprep.subr.mxu0 0.0
  %442 = vmatpush1.msra.mxu0 %v122
  %443 = vmatprep.subr.mxu0 0.0
  %444 = vmatpush1.msra.mxu0 %v121
  %445 = vmatprep.subr.mxu0 0.0
  %446 = vmatpush1.msra.mxu0 %v120
  %447 = vmatprep.subr.mxu0 0.0
  %448 = vmatpush1.msra.mxu0 %v119
  %449 = vmatprep.subr.mxu0 0.0
  %450 = vmatpush1.msra.mxu0 %v118
  %451 = vmatprep.subr.mxu0 0.0
  %452 = vmatpush1.msra.mxu0 %v117
  %453 = vmatprep.subr.mxu0 0.0
  %454 = vmatpush1.msra.mxu0 %v116
  %455 = vmatprep.subr.mxu0 0.0
  %456 = vmatpush1.msra.mxu0 %v115
  %457 = vmatprep.subr.mxu0 0.0
  %458 = vmatpush1.msra.mxu0 %v114
  %459 = vmatprep.subr.mxu0 0.0
  %460 = vmatpush1.msra.mxu0 %v113
  %461 = vmatprep.subr.mxu0 0.0
  %462 = vmatpush2.msra.mxu0 0.0
  %463 = vmatprep.subr.mxu0 0.0
  %464 = vmatpush2.msra.mxu0 0.0
  %465 = vmatprep.subr.mxu0 0.0
  %466 = vmatpush2.msra.mxu0 0.0
  %467 = vmatprep.subr.mxu0 0.0
  %468 = vmatpush2.msra.mxu0 0.0
  %469 = vmatprep.subr.mxu0 0.0
  %470 = vmatpush2.msra.mxu0 0.0
  %471 = vmatprep.subr.mxu0 0.0
  %472 = vmatpush2.msra.mxu0 0.0
  %473 = vmatprep.subr.mxu0 0.0
  %474 = vmatpush2.msra.mxu0 0.0
  %475 = vmatprep.subr.mxu0 0.0
  %476 = vmatpush2.msra.mxu0 0.0
  %477 = vmatprep.subr.mxu0 0.0
  %478 = vmatpush2.msra.mxu0 0.0
  %479 = vmatprep.subr.mxu0 0.0
  %480 = vmatpush2.msra.mxu0 0.0
  %481 = vmatprep.subr.mxu0 0.0
  %482 = vmatpush2.msra.mxu0 0.0
  %483 = vmatprep.subr.mxu0 0.0
  %484 = vmatpush2.msra.mxu0 0.0
  %485 = vmatprep.subr.mxu0 0.0
  %486 = vmatpush2.msra.mxu0 0.0
  %487 = vmatprep.subr.mxu0 0.0
  %488 = vmatpush2.msra.mxu0 0.0
  %489 = vmatprep.subr.mxu0 0.0
  %490 = vmatpush2.msra.mxu0 0.0
  %491 = vmatprep.subr.mxu0 0.0
  %492 = vmatpush2.msra.mxu0 0.0
  %493 = vmatprep.mubr.f32.mxu0 0.0
  %494 = vmatmul.mubr.f32.gmra.mxu0 %v424
  %v495 = vpop.f32.mrf.mxu0
  %v496 = vadd.f32 %v428, %v495
  %v497 = vpop.f32.mrf.mxu0
  %498 = vdwg.mxu0
  %v499 = vmax.f32 %v496, 0.0
  %s500 = scalar_lea.vmem [#allocation3], 32
  %501 = vst [vmem:[%s500] sm:$0xff] %v499
  %s502 = scalar_lea.vmem [#allocation2], 40
  %v503 = vld [vmem:[%s502] sm:$0xff]
  %504 = vmatprep.subr.mxu0 0.0
  %505 = vmatpush1.msra.mxu0 %v128
  %506 = vmatprep.subr.mxu0 0.0
  %507 = vmatpush1.msra.mxu0 %v127
  %508 = vmatprep.subr.mxu0 0.0
  %509 = vmatpush1.msra.mxu0 %v126
  %510 = vmatprep.subr.mxu0 0.0
  %511 = vmatpush1.msra.mxu0 %v125
  %512 = vmatprep.subr.mxu0 0.0
  %513 = vmatpush1.msra.mxu0 %v124
  %514 = vmatprep.subr.mxu0 0.0
  %515 = vmatpush1.msra.mxu0 %v123
  %516 = vmatprep.subr.mxu0 0.0
  %517 = vmatpush1.msra.mxu0 %v122
  %518 = vmatprep.subr.mxu0 0.0
  %519 = vmatpush1.msra.mxu0 %v121
  %520 = vmatprep.subr.mxu0 0.0
  %521 = vmatpush1.msra.mxu0 %v120
  %522 = vmatprep.subr.mxu0 0.0
  %523 = vmatpush1.msra.mxu0 %v119
  %524 = vmatprep.subr.mxu0 0.0
  %525 = vmatpush1.msra.mxu0 %v118
  %526 = vmatprep.subr.mxu0 0.0
  %527 = vmatpush1.msra.mxu0 %v117
  %528 = vmatprep.subr.mxu0 0.0
  %529 = vmatpush1.msra.mxu0 %v116
  %530 = vmatprep.subr.mxu0 0.0
  %531 = vmatpush1.msra.mxu0 %v115
  %532 = vmatprep.subr.mxu0 0.0
  %533 = vmatpush1.msra.mxu0 %v114
  %534 = vmatprep.subr.mxu0 0.0
  %535 = vmatpush1.msra.mxu0 %v113
  %536 = vmatprep.subr.mxu0 0.0
  %537 = vmatpush2.msra.mxu0 0.0
  %538 = vmatprep.subr.mxu0 0.0
  %539 = vmatpush2.msra.mxu0 0.0
  %540 = vmatprep.subr.mxu0 0.0
  %541 = vmatpush2.msra.mxu0 0.0
  %542 = vmatprep.subr.mxu0 0.0
  %543 = vmatpush2.msra.mxu0 0.0
  %544 = vmatprep.subr.mxu0 0.0
  %545 = vmatpush2.msra.mxu0 0.0
  %546 = vmatprep.subr.mxu0 0.0
  %547 = vmatpush2.msra.mxu0 0.0
  %548 = vmatprep.subr.mxu0 0.0
  %549 = vmatpush2.msra.mxu0 0.0
  %550 = vmatprep.subr.mxu0 0.0
  %551 = vmatpush2.msra.mxu0 0.0
  %552 = vmatprep.subr.mxu0 0.0
  %553 = vmatpush2.msra.mxu0 0.0
  %554 = vmatprep.subr.mxu0 0.0
  %555 = vmatpush2.msra.mxu0 0.0
  %556 = vmatprep.subr.mxu0 0.0
  %557 = vmatpush2.msra.mxu0 0.0
  %558 = vmatprep.subr.mxu0 0.0
  %559 = vmatpush2.msra.mxu0 0.0
  %560 = vmatprep.subr.mxu0 0.0
  %561 = vmatpush2.msra.mxu0 0.0
  %562 = vmatprep.subr.mxu0 0.0
  %563 = vmatpush2.msra.mxu0 0.0
  %564 = vmatprep.subr.mxu0 0.0
  %565 = vmatpush2.msra.mxu0 0.0
  %566 = vmatprep.subr.mxu0 0.0
  %567 = vmatpush2.msra.mxu0 0.0
  %568 = vmatprep.mubr.f32.mxu0 0.0
  %569 = vmatmul.mubr.f32.gmra.mxu0 %v499
  %v570 = vpop.f32.mrf.mxu0
  %v571 = vadd.f32 %v503, %v570
  %v572 = vpop.f32.mrf.mxu0
  %573 = vdwg.mxu0
  %v574 = vmax.f32 %v571, 0.0
  %s575 = scalar_lea.vmem [#allocation3], 40
  %576 = vst [vmem:[%s575] sm:$0xff] %v574
  %s577 = scalar_lea.vmem [#allocation2], 48
  %v578 = vld [vmem:[%s577] sm:$0xff]
  %579 = vmatprep.subr.mxu0 0.0
  %580 = vmatpush1.msra.mxu0 %v128
  %581 = vmatprep.subr.mxu0 0.0
  %582 = vmatpush1.msra.mxu0 %v127
  %583 = vmatprep.subr.mxu0 0.0
  %584 = vmatpush1.msra.mxu0 %v126
  %585 = vmatprep.subr.mxu0 0.0
  %586 = vmatpush1.msra.mxu0 %v125
  %587 = vmatprep.subr.mxu0 0.0
  %588 = vmatpush1.msra.mxu0 %v124
  %589 = vmatprep.subr.mxu0 0.0
  %590 = vmatpush1.msra.mxu0 %v123
  %591 = vmatprep.subr.mxu0 0.0
  %592 = vmatpush1.msra.mxu0 %v122
  %593 = vmatprep.subr.mxu0 0.0
  %594 = vmatpush1.msra.mxu0 %v121
  %595 = vmatprep.subr.mxu0 0.0
  %596 = vmatpush1.msra.mxu0 %v120
  %597 = vmatprep.subr.mxu0 0.0
  %598 = vmatpush1.msra.mxu0 %v119
  %599 = vmatprep.subr.mxu0 0.0
  %600 = vmatpush1.msra.mxu0 %v118
  %601 = vmatprep.subr.mxu0 0.0
  %602 = vmatpush1.msra.mxu0 %v117
  %603 = vmatprep.subr.mxu0 0.0
  %604 = vmatpush1.msra.mxu0 %v116
  %605 = vmatprep.subr.mxu0 0.0
  %606 = vmatpush1.msra.mxu0 %v115
  %607 = vmatprep.subr.mxu0 0.0
  %608 = vmatpush1.msra.mxu0 %v114
  %609 = vmatprep.subr.mxu0 0.0
  %610 = vmatpush1.msra.mxu0 %v113
  %611 = vmatprep.subr.mxu0 0.0
  %612 = vmatpush2.msra.mxu0 0.0
  %613 = vmatprep.subr.mxu0 0.0
  %614 = vmatpush2.msra.mxu0 0.0
  %615 = vmatprep.subr.mxu0 0.0
  %616 = vmatpush2.msra.mxu0 0.0
  %617 = vmatprep.subr.mxu0 0.0
  %618 = vmatpush2.msra.mxu0 0.0
  %619 = vmatprep.subr.mxu0 0.0
  %620 = vmatpush2.msra.mxu0 0.0
  %621 = vmatprep.subr.mxu0 0.0
  %622 = vmatpush2.msra.mxu0 0.0
  %623 = vmatprep.subr.mxu0 0.0
  %624 = vmatpush2.msra.mxu0 0.0
  %625 = vmatprep.subr.mxu0 0.0
  %626 = vmatpush2.msra.mxu0 0.0
  %627 = vmatprep.subr.mxu0 0.0
  %628 = vmatpush2.msra.mxu0 0.0
  %629 = vmatprep.subr.mxu0 0.0
  %630 = vmatpush2.msra.mxu0 0.0
  %631 = vmatprep.subr.mxu0 0.0
  %632 = vmatpush2.msra.mxu0 0.0
  %633 = vmatprep.subr.mxu0 0.0
  %634 = vmatpush2.msra.mxu0 0.0
  %635 = vmatprep.subr.mxu0 0.0
  %636 = vmatpush2.msra.mxu0 0.0
  %637 = vmatprep.subr.mxu0 0.0
  %638 = vmatpush2.msra.mxu0 0.0
  %639 = vmatprep.subr.mxu0 0.0
  %640 = vmatpush2.msra.mxu0 0.0
  %641 = vmatprep.subr.mxu0 0.0
  %642 = vmatpush2.msra.mxu0 0.0
  %643 = vmatprep.mubr.f32.mxu0 0.0
  %644 = vmatmul.mubr.f32.gmra.mxu0 %v574
  %v645 = vpop.f32.mrf.mxu0
  %v646 = vadd.f32 %v578, %v645
  %v647 = vpop.f32.mrf.mxu0
  %648 = vdwg.mxu0
  %v649 = vmax.f32 %v646, 0.0
  %s650 = scalar_lea.vmem [#allocation3], 48
  %651 = vst [vmem:[%s650] sm:$0xff] %v649
  %s652 = scalar_lea.vmem [#allocation2], 56
  %v653 = vld [vmem:[%s652] sm:$0xff]
  %654 = vmatprep.subr.mxu0 0.0
  %655 = vmatpush1.msra.mxu0 %v128
  %656 = vmatprep.subr.mxu0 0.0
  %657 = vmatpush1.msra.mxu0 %v127
  %658 = vmatprep.subr.mxu0 0.0
  %659 = vmatpush1.msra.mxu0 %v126
  %660 = vmatprep.subr.mxu0 0.0
  %661 = vmatpush1.msra.mxu0 %v125
  %662 = vmatprep.subr.mxu0 0.0
  %663 = vmatpush1.msra.mxu0 %v124
  %664 = vmatprep.subr.mxu0 0.0
  %665 = vmatpush1.msra.mxu0 %v123
  %666 = vmatprep.subr.mxu0 0.0
  %667 = vmatpush1.msra.mxu0 %v122
  %668 = vmatprep.subr.mxu0 0.0
  %669 = vmatpush1.msra.mxu0 %v121
  %670 = vmatprep.subr.mxu0 0.0
  %671 = vmatpush1.msra.mxu0 %v120
  %672 = vmatprep.subr.mxu0 0.0
  %673 = vmatpush1.msra.mxu0 %v119
  %674 = vmatprep.subr.mxu0 0.0
  %675 = vmatpush1.msra.mxu0 %v118
  %676 = vmatprep.subr.mxu0 0.0
  %677 = vmatpush1.msra.mxu0 %v117
  %678 = vmatprep.subr.mxu0 0.0
  %679 = vmatpush1.msra.mxu0 %v116
  %680 = vmatprep.subr.mxu0 0.0
  %681 = vmatpush1.msra.mxu0 %v115
  %682 = vmatprep.subr.mxu0 0.0
  %683 = vmatpush1.msra.mxu0 %v114
  %684 = vmatprep.subr.mxu0 0.0
  %685 = vmatpush1.msra.mxu0 %v113
  %686 = vmatprep.subr.mxu0 0.0
  %687 = vmatpush2.msra.mxu0 0.0
  %688 = vmatprep.subr.mxu0 0.0
  %689 = vmatpush2.msra.mxu0 0.0
  %690 = vmatprep.subr.mxu0 0.0
  %691 = vmatpush2.msra.mxu0 0.0
  %692 = vmatprep.subr.mxu0 0.0
  %693 = vmatpush2.msra.mxu0 0.0
  %694 = vmatprep.subr.mxu0 0.0
  %695 = vmatpush2.msra.mxu0 0.0
  %696 = vmatprep.subr.mxu0 0.0
  %697 = vmatpush2.msra.mxu0 0.0
  %698 = vmatprep.subr.mxu0 0.0
  %699 = vmatpush2.msra.mxu0 0.0
  %700 = vmatprep.subr.mxu0 0.0
  %701 = vmatpush2.msra.mxu0 0.0
  %702 = vmatprep.subr.mxu0 0.0
  %703 = vmatpush2.msra.mxu0 0.0
  %704 = vmatprep.subr.mxu0 0.0
  %705 = vmatpush2.msra.mxu0 0.0
  %706 = vmatprep.subr.mxu0 0.0
  %707 = vmatpush2.msra.mxu0 0.0
  %708 = vmatprep.subr.mxu0 0.0
  %709 = vmatpush2.msra.mxu0 0.0
  %710 = vmatprep.subr.mxu0 0.0
  %711 = vmatpush2.msra.mxu0 0.0
  %712 = vmatprep.subr.mxu0 0.0
  %713 = vmatpush2.msra.mxu0 0.0
  %714 = vmatprep.subr.mxu0 0.0
  %715 = vmatpush2.msra.mxu0 0.0
  %716 = vmatprep.subr.mxu0 0.0
  %717 = vmatpush2.msra.mxu0 0.0
  %718 = vmatprep.mubr.f32.mxu0 0.0
  %719 = vmatmul.mubr.f32.gmra.mxu0 %v649
  %v720 = vpop.f32.mrf.mxu0
  %v721 = vadd.f32 %v653, %v720
  %v722 = vpop.f32.mrf.mxu0
  %723 = vdwg.mxu0
  %v724 = vmax.f32 %v721, 0.0
  %s725 = scalar_lea.vmem [#allocation3], 56
  %726 = vst [vmem:[%s725] sm:$0xff] %v724
  %727 = vst [vmem:[%s7] sm:$0xff] %v724
  %v728 = vld [vmem:[%s4] sm:$0x1]
  %v729 = vld [vmem:[#allocation3] sm:$0xff]
  %v730 = vld [vmem:[#allocation3 + $0x8] sm:$0xff]
  %v731 = vld [vmem:[#allocation3 + $0x10] sm:$0xff]
  %v732 = vld [vmem:[#allocation3 + $0x18] sm:$0xff]
  %v733 = vld [vmem:[#allocation3 + $0x20] sm:$0xff]
  %v734 = vld [vmem:[#allocation3 + $0x28] sm:$0xff]
  %v735 = vld [vmem:[#allocation3 + $0x30] sm:$0xff]
  %v736 = vld [vmem:[#allocation3 + $0x38] sm:$0xff]
  %v738 = vlaneseq
  %v739 = vshrl.u32 %v738, 7
  %v740 = vsub.s32 0, %v739
  %v741 = vrot.slane %v728, %v740
  %v743 = vmul.f32 %v729, %v741
  %v744 = vmul.f32 %v730, %v741
  %v745 = vmul.f32 %v731, %v741
  %v746 = vmul.f32 %v732, %v741
  %v747 = vmul.f32 %v733, %v741
  %v748 = vmul.f32 %v734, %v741
  %v749 = vmul.f32 %v735, %v741
  %v750 = vmul.f32 %v736, %v741
  %751 = vadd.xlane.f32.xlu0 %v743
  %v752 = vpop.xlane.xlu0 %751
  %753 = vadd.xlane.f32.xlu0 %v744
  %v754 = vpop.xlane.xlu0 %753
  %755 = vadd.xlane.f32.xlu0 %v745
  %v756 = vpop.xlane.xlu0 %755
  %757 = vadd.xlane.f32.xlu0 %v746
  %v758 = vpop.xlane.xlu0 %757
  %759 = vadd.xlane.f32.xlu0 %v747
  %v760 = vpop.xlane.xlu0 %759
  %761 = vadd.xlane.f32.xlu0 %v748
  %v762 = vpop.xlane.xlu0 %761
  %763 = vadd.xlane.f32.xlu0 %v749
  %v764 = vpop.xlane.xlu0 %763
  %765 = vadd.xlane.f32.xlu0 %v750
  %v766 = vpop.xlane.xlu0 %765
  %v767 = vld [vmem:[#allocation4] sm:$0x1]
  %v769 = vlaneseq
  %v770 = vshrl.u32 %v769, 7
  %v771 = vsub.s32 0, %v770
  %v772 = vrot.slane %v767, %v771
  %773 = vset.pattern.permute.xlu0 0
  %774 = vperm.xlu0 %773, %v772
  %v775 = vpop.permute.xlu0 %774
  %v777 = vadd.f32 %v752, %v775
  %v778 = vadd.f32 %v754, %v775
  %v779 = vadd.f32 %v756, %v775
  %v780 = vadd.f32 %v758, %v775
  %v781 = vadd.f32 %v760, %v775
  %v782 = vadd.f32 %v762, %v775
  %v783 = vadd.f32 %v764, %v775
  %v784 = vadd.f32 %v766, %v775
  %v793 = vlaneseq
  %v794 = vand.u32 %v793, 127
  %v795 = vlaneseq
  %v796 = vshrl.u32 %v795, 7
  %v797 = vsub.s32 %v794, %v796
  %v798 = vrot.slane %v777, %v797
  %v799 = vlaneseq
  %v800 = vshrl.u32 %v799, 7
  %v801 = vsub.s32 %v794, %v800
  %v802 = vrot.slane %v778, %v801
  %v803 = vlaneseq
  %v804 = vshrl.u32 %v803, 7
  %v805 = vsub.s32 %v794, %v804
  %v806 = vrot.slane %v779, %v805
  %v807 = vlaneseq
  %v808 = vshrl.u32 %v807, 7
  %v809 = vsub.s32 %v794, %v808
  %v810 = vrot.slane %v780, %v809
  %v811 = vlaneseq
  %v812 = vshrl.u32 %v811, 7
  %v813 = vsub.s32 %v794, %v812
  %v814 = vrot.slane %v781, %v813
  %v815 = vlaneseq
  %v816 = vshrl.u32 %v815, 7
  %v817 = vsub.s32 %v794, %v816
  %v818 = vrot.slane %v782, %v817
  %v819 = vlaneseq
  %v820 = vshrl.u32 %v819, 7
  %v821 = vsub.s32 %v794, %v820
  %v822 = vrot.slane %v783, %v821
  %v823 = vlaneseq
  %v824 = vshrl.u32 %v823, 7
  %v825 = vsub.s32 %v794, %v824
  %v826 = vrot.slane %v784, %v825
  %vm827 = vcmask 1041409
  %v828 = vsel %vm827, %v802, %v798
  %vm829 = vcmask 1042434
  %v830 = vsel %vm829, %v806, %v828
  %vm831 = vcmask 1043459
  %v832 = vsel %vm831, %v810, %v830
  %vm833 = vcmask 1044484
  %v834 = vsel %vm833, %v814, %v832
  %vm835 = vcmask 1045509
  %v836 = vsel %vm835, %v818, %v834
  %vm837 = vcmask 1046534
  %v838 = vsel %vm837, %v822, %v836
  %vm839 = vcmask 1047559
  %v840 = vsel %vm839, %v826, %v838
  %vm842 = vcmask 64512
  %843 = vst.msk [vmem:[%s6] sm:$0xff] %vm842, %v840
  // Predicated region
  $region26: #{model_forward.1} parent=0 // pred_check
    _
  $region27: #{model_forward.1} parent=0 // pred_check_branch
    %845 = sbr.rel (0) target = $region29
  $region28: #{model_forward.1} parent=0 // pred_region
    _
  $region29: #{model_forward.1} parent=0 // pred_fallthru
    _
  // Predicated region
  $region30: #{model_forward.1} parent=0 // pred_check
    _
  $region31: #{model_forward.1} parent=0 // pred_check_branch
    %847 = sbr.rel (0) target = $region33
  $region32: #{model_forward.1} parent=0 // pred_region
    _
  $region33: #{model_forward.1} parent=0 // pred_fallthru
    _
  // Predicated region
  $region34: #{model_forward.1} parent=0 // pred_check
    _
  $region35: #{model_forward.1} parent=0 // pred_check_branch
    %849 = sbr.rel (0) target = $region37
  $region36: #{model_forward.1} parent=0 // pred_region
    _
  $region37: #{model_forward.1} parent=0 // pred_fallthru
    _
  // Predicated region
  $region38: #{model_forward.1} parent=0 // pred_check
    _
  $region39: #{model_forward.1} parent=0 // pred_check_branch
    %851 = sbr.rel (0) target = $region41
  $region40: #{model_forward.1} parent=0 // pred_region
    _
  $region41: #{model_forward.1} parent=0 // pred_fallthru
    _

</llo_original>
